<compile_context>
chip_gen: v6e
topology: v6e:2x2x1
jax: 0.10.0
libtpu: 0.0.40
codegen_flags: <defaults>
</compile_context>

<pallas_src>
import functools

import jax
import jax.numpy as jnp
from jax import lax
from jax.experimental import pallas as pl
from jax.experimental.pallas import tpu as pltpu


def _avg_fc_kernel(x_ref, wt_ref, o_ref, acc_ref, *, inv_s):
    # x_ref: (tb, ts, D)   wt_ref: (D, O)   o_ref: (tb, O)   acc_ref: (tb, D) f32
    si = pl.program_id(1)

    @pl.when(si == 0)
    def _init():
        acc_ref[...] = jnp.zeros_like(acc_ref)

    # Running sum over the sequence tile (sublane reduction), f32 accumulation.
    acc_ref[...] += jnp.sum(x_ref[...].astype(jnp.float32), axis=1)

    @pl.when(si == pl.num_programs(1) - 1)
    def _finalize():
        avg = acc_ref[...] * inv_s                      # fold mean's divide into a const mul
        y = lax.dot_general(                            # contract on D; no transpose in-kernel
            avg, wt_ref[...].astype(jnp.float32),
            dimension_numbers=(((1,), (0,)), ((), ())),
            preferred_element_type=jnp.float32)
        o_ref[...] = y.astype(o_ref.dtype)


def _pick_tile(n, target, align):
    """Largest tile <= target that is either the full dim or an `align`-multiple divisor."""
    if n <= target:
        return n
    t = (target // align) * align
    while t >= align:
        if n % t == 0:
            return t
        t -= align
    return n  # fall back to full dim (always a legal block shape)


@jax.jit
def average_forward(x, weight, bias):
    B, S, D = x.shape
    O = weight.shape[0]
    wt = weight.T                                        # (D, O), XLA-side (free)

    # Tile selection: keep a double-buffered x tile well under scoped VMEM
    # (conservative for v7x's 64 MiB physical / 32 MiB scoped default).
    itemsize = jnp.dtype(x.dtype).itemsize
    tb = _pick_tile(B, 128, 8)
    ts_target = max(8, (4 << 20) // max(1, tb * D * itemsize))   # ~8 MiB double-buffered
    ts = _pick_tile(S, ts_target, 8)
    grid = (B // tb, S // ts)

    kernel = functools.partial(_avg_fc_kernel, inv_s=1.0 / S)

    cost = pl.CostEstimate(
        flops=B * S * D + 2 * B * D * O,
        transcendentals=0,
        bytes_accessed=(x.size * itemsize
                        + wt.size * jnp.dtype(wt.dtype).itemsize
                        + B * O * itemsize),
    )

    out = pl.pallas_call(
        kernel,
        out_shape=jax.ShapeDtypeStruct((B, O), x.dtype),
        grid_spec=pltpu.PrefetchScalarGridSpec(
            num_scalar_prefetch=0,
            grid=grid,
            in_specs=[
                pl.BlockSpec((tb, ts, D), lambda bi, si: (bi, si, 0)),
                pl.BlockSpec((D, O), lambda bi, si: (0, 0)),  # resident (same block every step)
            ],
            out_specs=pl.BlockSpec((tb, O), lambda bi, si: (bi, 0)),
            scratch_shapes=[pltpu.VMEM((tb, D), jnp.float32)],
        ),
        compiler_params=pltpu.CompilerParams(
            dimension_semantics=("parallel", "arbitrary"),  # B across cores, S is the reduction
        ),
        cost_estimate=cost,
    )(x, wt)

    # Bias on the scalar-sized (B, O) result outside the kernel; .squeeze() like PyTorch.
    return jnp.squeeze(out + bias[None, :])


if __name__ == "__main__":
    # Shapes implied by the forward: x: (batch, seq, input_size), Linear(input_size, output_size)
    B, S, D = 2, 8, 32          # input_size = 32
    O = 1                       # output_size = 1 -> squeeze yields shape (B,)

    key = jax.random.PRNGKey(0)
    kx, kw, kb = jax.random.split(key, 3)

    x = jax.random.normal(kx, (B, S, D), dtype=jnp.float32)

    # nn.Linear-style init: U(-1/sqrt(in), 1/sqrt(in))
    bound = 1.0 / jnp.sqrt(jnp.float32(D))
    weight = jax.random.uniform(kw, (O, D), jnp.float32, -bound, bound)
    bias = jax.random.uniform(kb, (O,), jnp.float32, -bound, bound)

    y = average_forward(x, weight, bias)
    jax.block_until_ready(y)

    # Pure-JAX reference check
    ref = jnp.squeeze(jnp.mean(x, axis=1) @ weight.T + bias)
    assert y.shape == ref.shape == (B,)
    assert jnp.allclose(y, ref, atol=1e-5, rtol=1e-5)

    print("KERNEL_OK")
</pallas_src>

<mosaic_0001>
module attributes {stable_mosaic.version = 11 : i64} {
  func.func @_avg_fc_kernel(%arg0: i32, %arg1: i32, %arg2: memref<2x8x32xf32, #tpu.memory_space<vmem>>, %arg3: memref<32x1xf32, #tpu.memory_space<vmem>>, %arg4: memref<2x1xf32, #tpu.memory_space<vmem>>, %arg5: memref<2x32xf32, #tpu.memory_space<vmem>>) attributes {dimension_semantics = [#tpu.dimension_semantics<parallel>, #tpu.dimension_semantics<arbitrary>], iteration_bounds = array<i64: 1, 1>, scalar_prefetch = 0 : i64, scratch_operands = 1 : i64, tpu.core_type = #tpu.core_type<tc>, window_params = [{transform_indices = @transform_0, window_bounds = array<i64: 2, 8, 32>}, {pipeline_mode = #tpu.pipeline_mode<synchronous>, transform_indices = @transform_1, window_bounds = array<i64: 32, 1>}, {transform_indices = @transform_2, window_bounds = array<i64: 2, 1>}]} {
    %c0_i32 = arith.constant 0 : i32
    %0 = arith.cmpi eq, %arg1, %c0_i32 : i32
    %1 = arith.extui %0 : i1 to i32
    %c0_i32_0 = arith.constant 0 : i32
    %2 = arith.cmpi ne, %1, %c0_i32_0 : i32
    scf.if %2 {
      %cst_9 = arith.constant 0.000000e+00 : f32
      %11 = vector.broadcast %cst_9 : f32 to vector<2x32xf32>
      %c0_10 = arith.constant 0 : index
      %c0_11 = arith.constant 0 : index
      %12 = vector.load %arg5[%c0_10, %c0_11] : memref<2x32xf32, #tpu.memory_space<vmem>>, vector<2x32xf32>
      tpu.vector_store %arg5[%c0_10, %c0_11], %11 {strides = array<i32>} : memref<2x32xf32, #tpu.memory_space<vmem>>, vector<2x32xf32>,
    } else {
    }
    %c0 = arith.constant 0 : index
    %c0_1 = arith.constant 0 : index
    %3 = vector.load %arg5[%c0, %c0_1] : memref<2x32xf32, #tpu.memory_space<vmem>>, vector<2x32xf32>
    %c0_2 = arith.constant 0 : index
    %c0_3 = arith.constant 0 : index
    %c0_4 = arith.constant 0 : index
    %4 = vector.load %arg2[%c0_2, %c0_3, %c0_4] : memref<2x8x32xf32, #tpu.memory_space<vmem>>, vector<2x8x32xf32>
    %cst = arith.constant dense<0.000000e+00> : vector<2x32xf32>
    %5 = vector.multi_reduction <add>, %4, %cst [1] : vector<2x8x32xf32> to vector<2x32xf32>
    %6 = arith.addf %3, %5 : vector<2x32xf32>
    %c0_5 = arith.constant 0 : index
    %c0_6 = arith.constant 0 : index
    %7 = vector.load %arg5[%c0_5, %c0_6] : memref<2x32xf32, #tpu.memory_space<vmem>>, vector<2x32xf32>
    tpu.vector_store %arg5[%c0_5, %c0_6], %6 {strides = array<i32>} : memref<2x32xf32, #tpu.memory_space<vmem>>, vector<2x32xf32>,
    %c0_i32_7 = arith.constant 0 : i32
    %8 = arith.cmpi eq, %arg1, %c0_i32_7 : i32
    %9 = arith.extui %8 : i1 to i32
    %c0_i32_8 = arith.constant 0 : i32
    %10 = arith.cmpi ne, %9, %c0_i32_8 : i32
    scf.if %10 {
      %c0_9 = arith.constant 0 : index
      %c0_10 = arith.constant 0 : index
      %11 = vector.load %arg5[%c0_9, %c0_10] : memref<2x32xf32, #tpu.memory_space<vmem>>, vector<2x32xf32>
      %cst_11 = arith.constant 1.250000e-01 : f32
      %12 = vector.broadcast %cst_11 : f32 to vector<2x32xf32>
      %13 = arith.mulf %11, %12 : vector<2x32xf32>
      %c0_12 = arith.constant 0 : index
      %c0_13 = arith.constant 0 : index
      %14 = vector.load %arg3[%c0_12, %c0_13] : memref<32x1xf32, #tpu.memory_space<vmem>>, vector<32x1xf32>
      %cst_14 = arith.constant dense<0.000000e+00> : vector<2x1xf32>
      %15 = tpu.matmul %13, %14, %cst_14 {dimension_numbers = #tpu.dot_dimension_numbers<[1], [0], [0], [1], [0, 0, 1, 1], [], []>} : vector<2x32xf32>, vector<32x1xf32>, vector<2x1xf32> -> vector<2x1xf32>
      %c0_15 = arith.constant 0 : index
      %c0_16 = arith.constant 0 : index
      %16 = vector.load %arg4[%c0_15, %c0_16] : memref<2x1xf32, #tpu.memory_space<vmem>>, vector<2x1xf32>
      tpu.vector_store %arg4[%c0_15, %c0_16], %15 {strides = array<i32>} : memref<2x1xf32, #tpu.memory_space<vmem>>, vector<2x1xf32>,
    } else {
    }
    return
  }
  func.func @transform_0(%arg0: i32, %arg1: i32) -> (i32, i32, i32) {
    %c0_i32 = arith.constant 0 : i32
    %c0_i32_0 = arith.constant 0 : i32
    return %arg0, %arg1, %c0_i32 : i32, i32, i32
  }
  func.func @transform_1(%arg0: i32, %arg1: i32) -> (i32, i32) {
    %c0_i32 = arith.constant 0 : i32
    %c0_i32_0 = arith.constant 0 : i32
    %c0_i32_1 = arith.constant 0 : i32
    return %c0_i32, %c0_i32_0 : i32, i32
  }
  func.func @transform_2(%arg0: i32, %arg1: i32) -> (i32, i32) {
    %c0_i32 = arith.constant 0 : i32
    %c0_i32_0 = arith.constant 0 : i32
    return %arg0, %c0_i32 : i32, i32
  }
}

</mosaic_0001>

<llo_original>
// kernel: average_forward.1
$region0: #{average_forward.1}
  #allocation0 [shape = 'u32[]', space=smem, size = 0x4, offset = 0x4, fixed_abs, tag = 'smem constant byte address 0x4 - core index']
  #allocation1 [shape = 'u32[144,128]{1,0:T(1,128)}', space=vmem, size = 0x12000, scoped, tag = 'internal scratch']
  #allocation2 [shape = 'f32[2,32]{1,0:T(2,128)}', space=vmem, size = 0x400, scoped, tag = 'scratch operand']
  %s0 = inlined_call_operand.vmem [shape: f32[2,8,32], index: 0, kind: input, shape index: {}]
  %s1 = inlined_call_operand.vmem [shape: f32[32,1], index: 1, kind: input, shape index: {}]
  %s2 = inlined_call_operand.vmem [shape: f32[2,1], index: 2, kind: output, shape index: {}]
  %s3 = sld [smem:[#allocation0]]
  $region26: #{average_forward.1} parent=0
    _
  %s5 = ssub.s32 1, %s3
  %s6 = scalar_select 0, %s5, %s3
  // Predicated region
  $region2: #{average_forward.1} parent=0 // pred_check
    _
  $region3: #{average_forward.1} parent=0 // pred_check_branch
    %8 = sbr.rel (0) target = $region5
  $region4: #{average_forward.1} parent=0 // pred_region
    _
  $region5: #{average_forward.1} parent=0 // pred_fallthru
    _
  // Predicated region
  $region6: #{average_forward.1} parent=0 // pred_check
    _
  $region7: #{average_forward.1} parent=0 // pred_check_branch
    %10 = sbr.rel (0) target = $region9
  $region8: #{average_forward.1} parent=0 // pred_region
    _
  $region9: #{average_forward.1} parent=0 // pred_fallthru
    _
  %p11 = scmp.eq.s32.totalorder 0, 0
  // Predicated region
  $region10: #{average_forward.1} parent=0 // pred_check
    %p12 = pneg %p11
  $region11: #{average_forward.1} parent=0 // pred_check_branch
    %14 = sbr.rel (%p12) target = $region13
  $region12: #{average_forward.1} parent=0 // pred_region
    %vm15 = vcmask 254976
    %16 = vst.msk [vmem:[#allocation2] sm:$0x3] %vm15, 0.0
  $region13: #{average_forward.1} parent=0 // pred_fallthru
    _
  %v17 = vld [vmem:[#allocation2] sm:$0x3]
  %v18 = vld [vmem:[%s0] sm:$0xff]
  %v19 = vld [vmem:[%s0 + $0x8] sm:$0xff]
  %vm20 = vcmask 261120
  %v21 = vsel %vm20, %v18, 0.0
  %v22 = vrot.slane %v21, 4
  %v23 = vadd.f32 %v21, %v22
  %v24 = vrot.slane %v23, 2
  %v25 = vadd.f32 %v23, %v24
  %v26 = vrot.slane %v25, 1
  %v27 = vadd.f32 %v25, %v26
  %v28 = vsel %vm20, %v19, 0.0
  %v29 = vrot.slane %v28, 4
  %v30 = vadd.f32 %v28, %v29
  %v31 = vrot.slane %v30, 2
  %v32 = vadd.f32 %v30, %v31
  %v33 = vrot.slane %v32, 1
  %v34 = vadd.f32 %v32, %v33
  %vm37 = vcmask 1041409
  %v38 = vsel %vm37, %v34, %v27
  %v40 = vadd.f32 %v17, %v38
  %vm41 = vcmask 254976
  %42 = vst.msk [vmem:[#allocation2] sm:$0x3] %vm41, %v40
  // Predicated region
  $region14: #{average_forward.1} parent=0 // pred_check
    %p43 = pneg %p11
  $region15: #{average_forward.1} parent=0 // pred_check_branch
    %45 = sbr.rel (%p43) target = $region17
  $region16: #{average_forward.1} parent=0 // pred_region
    %v46 = vld [vmem:[#allocation2] sm:$0x3]
    %v47 = vmul.f32 %v46, 0.125
    %v48 = vld [vmem:[%s1] sm:$0xff]
    %v49 = vld [vmem:[%s1 + $0x8] sm:$0xff]
    %v50 = vld [vmem:[%s1 + $0x10] sm:$0xff]
    %v51 = vld [vmem:[%s1 + $0x18] sm:$0xff]
    %v53 = vsel %vm20, %v47, 0
    %55 = vmatprep.subr.mxu0 0.0
    %56 = vmatpush1.msra.mxu0 0.0
    %57 = vmatprep.subr.mxu0 0.0
    %58 = vmatpush1.msra.mxu0 0.0
    %59 = vmatprep.subr.mxu0 0.0
    %60 = vmatpush1.msra.mxu0 0.0
    %61 = vmatprep.subr.mxu0 0.0
    %62 = vmatpush1.msra.mxu0 0.0
    %63 = vmatprep.subr.mxu0 0.0
    %64 = vmatpush1.msra.mxu0 0.0
    %65 = vmatprep.subr.mxu0 0.0
    %66 = vmatpush1.msra.mxu0 0.0
    %67 = vmatprep.subr.mxu0 0.0
    %68 = vmatpush1.msra.mxu0 0.0
    %69 = vmatprep.subr.mxu0 0.0
    %70 = vmatpush1.msra.mxu0 0.0
    %71 = vmatprep.subr.mxu0 0.0
    %72 = vmatpush1.msra.mxu0 0.0
    %73 = vmatprep.subr.mxu0 0.0
    %74 = vmatpush1.msra.mxu0 0.0
    %75 = vmatprep.subr.mxu0 0.0
    %76 = vmatpush1.msra.mxu0 0.0
    %77 = vmatprep.subr.mxu0 0.0
    %78 = vmatpush1.msra.mxu0 0.0
    %79 = vmatprep.subr.mxu0 0.0
    %80 = vmatpush1.msra.mxu0 %v51
    %81 = vmatprep.subr.mxu0 0.0
    %82 = vmatpush1.msra.mxu0 %v50
    %83 = vmatprep.subr.mxu0 0.0
    %84 = vmatpush1.msra.mxu0 %v49
    %85 = vmatprep.subr.mxu0 0.0
    %86 = vmatpush1.msra.mxu0 %v48
    %87 = vmatprep.subr.mxu0 0.0
    %88 = vmatpush2.msra.mxu0 0.0
    %89 = vmatprep.subr.mxu0 0.0
    %90 = vmatpush2.msra.mxu0 0.0
    %91 = vmatprep.subr.mxu0 0.0
    %92 = vmatpush2.msra.mxu0 0.0
    %93 = vmatprep.subr.mxu0 0.0
    %94 = vmatpush2.msra.mxu0 0.0
    %95 = vmatprep.subr.mxu0 0.0
    %96 = vmatpush2.msra.mxu0 0.0
    %97 = vmatprep.subr.mxu0 0.0
    %98 = vmatpush2.msra.mxu0 0.0
    %99 = vmatprep.subr.mxu0 0.0
    %100 = vmatpush2.msra.mxu0 0.0
    %101 = vmatprep.subr.mxu0 0.0
    %102 = vmatpush2.msra.mxu0 0.0
    %103 = vmatprep.subr.mxu0 0.0
    %104 = vmatpush2.msra.mxu0 0.0
    %105 = vmatprep.subr.mxu0 0.0
    %106 = vmatpush2.msra.mxu0 0.0
    %107 = vmatprep.subr.mxu0 0.0
    %108 = vmatpush2.msra.mxu0 0.0
    %109 = vmatprep.subr.mxu0 0.0
    %110 = vmatpush2.msra.mxu0 0.0
    %111 = vmatprep.subr.mxu0 0.0
    %112 = vmatpush2.msra.mxu0 0.0
    %113 = vmatprep.subr.mxu0 0.0
    %114 = vmatpush2.msra.mxu0 0.0
    %115 = vmatprep.subr.mxu0 0.0
    %116 = vmatpush2.msra.mxu0 0.0
    %117 = vmatprep.subr.mxu0 0.0
    %118 = vmatpush2.msra.mxu0 0.0
    %119 = vmatprep.mubr.f32.mxu0 0.0
    %120 = vmatmul.mubr.f32.gmra.mxu0 %v53
    %v121 = vpop.f32.mrf.mxu0
    %v122 = vadd.f32 0.0, %v121
    %v123 = vpop.f32.mrf.mxu0
    %124 = vdwg.mxu0
    %vm125 = vcmask 1024
    %126 = vst.msk [vmem:[%s2] sm:$0x3] %vm125, %v122
  $region17: #{average_forward.1} parent=0 // pred_fallthru
    _
  // Predicated region
  $region18: #{average_forward.1} parent=0 // pred_check
    _
  $region19: #{average_forward.1} parent=0 // pred_check_branch
    %128 = sbr.rel (0) target = $region21
  $region20: #{average_forward.1} parent=0 // pred_region
    _
  $region21: #{average_forward.1} parent=0 // pred_fallthru
    _
  // Predicated region
  $region22: #{average_forward.1} parent=0 // pred_check
    _
  $region23: #{average_forward.1} parent=0 // pred_check_branch
    %130 = sbr.rel (0) target = $region25
  $region24: #{average_forward.1} parent=0 // pred_region
    _
  $region25: #{average_forward.1} parent=0 // pred_fallthru
    _

</llo_original>
